<compile_context>
chip_gen: v5e
topology: v5e:2x2
jax: 0.10.0
libtpu: 0.0.40
codegen_flags: <defaults>
</compile_context>

<pallas_src>
import functools

import jax
import jax.numpy as jnp
from jax.experimental import pallas as pl
from jax.experimental.pallas import tpu as pltpu

_LANES = 128
_CHUNK_ROWS = 512            # 512 x 128 f32 = 256 KiB in-kernel working set
_EPS = 1e-12


def _round_up(x, m):
    return ((x + m - 1) // m) * m


@functools.lru_cache(maxsize=None)
def _tpu_budget():
    """(max_block_rows, vmem_limit_bytes) sized against the running chip."""
    cap = None
    try:
        cap = getattr(pltpu.get_tpu_info(), "vmem_capacity_bytes", None)
    except Exception:  # never fail on a hardware query; fall back to safe sizes
        cap = None
    if cap is not None and cap <= (80 << 20):
        # v7x-class core: 64 MiB VMEM, ~3.2 TB/s HBM -> 4 MiB/input blocks.
        # (2 in + 1 out) x 2 buffers x 4 MiB = 24 MiB, well under 48 MiB.
        return 8192, 48 << 20
    # v5e / v6e: 128 MiB physical VMEM; 2 MiB/input blocks already sit near
    # HBM roofline.  32 MiB raises v5e's 16 MiB default scoped limit.
    return 4096, 32 << 20


def _xsigmoid_f32(e):
    # 2*e/(1+exp(-e)) - e == e * tanh(e/2): one EUP tanh + one VPU mul,
    # no overflow for large |e|.
    return e * jnp.tanh(0.5 * e)


def _chunk_e(yt_ref, yp_ref, r0, chunk_rows):
    return (yt_ref[pl.ds(r0, chunk_rows), :].astype(jnp.float32)
            - yp_ref[pl.ds(r0, chunk_rows), :].astype(jnp.float32) + _EPS)


def _make_mean_kernel(block_rows, chunk_rows, rem, need_mask):
    """Per-block lane-wise partial-sum kernel.

    `rem` (static) = valid elements in the LAST grid block.  Positions past
    `rem` (explicit zero padding and Pallas partial-block padding, which is
    undefined data) have `e` zeroed BEFORE tanh.
    """
    nchunks = block_rows // chunk_rows

    def partial_sum(yt_ref, yp_ref, masked):
        def body(c, acc):
            r0 = pl.multiple_of(c * chunk_rows, 8)
            e = _chunk_e(yt_ref, yp_ref, r0, chunk_rows)
            if masked:
                row = jax.lax.broadcasted_iota(jnp.int32, e.shape, 0)
                col = jax.lax.broadcasted_iota(jnp.int32, e.shape, 1)
                lidx = (c * chunk_rows + row) * _LANES + col   # in-block index
                e = jnp.where(lidx < rem, e, 0.0)
            return acc + jnp.sum(_xsigmoid_f32(e), axis=0, keepdims=True)

        return jax.lax.fori_loop(0, nchunks, body,
                                 jnp.zeros((1, _LANES), jnp.float32))

    def kernel(yt_ref, yp_ref, part_ref):
        if need_mask:
            last = pl.num_programs(0) - 1

            @pl.when(pl.program_id(0) != last)
            def _():
                part_ref[...] = partial_sum(yt_ref, yp_ref, False)[None]

            @pl.when(pl.program_id(0) == last)
            def _():
                part_ref[...] = partial_sum(yt_ref, yp_ref, True)[None]
        else:
            part_ref[...] = partial_sum(yt_ref, yp_ref, False)[None]

    return kernel


def _make_elem_kernel(block_rows, chunk_rows):
    nchunks = block_rows // chunk_rows

    def kernel(yt_ref, yp_ref, out_ref):
        @pl.loop(0, nchunks)
        def _(c):
            r0 = pl.multiple_of(c * chunk_rows, 8)
            e = _chunk_e(yt_ref, yp_ref, r0, chunk_rows)
            out_ref[pl.ds(r0, chunk_rows), :] = _xsigmoid_f32(e).astype(out_ref.dtype)

    return kernel


def _prep(x):
    """Flatten; pad (only if needed) to a multiple of 128; fold to (rows, 128)."""
    flat = x.reshape(-1)
    n = flat.shape[0]
    if n % _LANES != 0:
        flat = jnp.pad(flat, (0, _LANES - n % _LANES))
    rows = flat.shape[0] // _LANES
    return flat.reshape(rows, _LANES), n


def _pick_blocking(rows, max_rows):
    """Choose (block_rows, chunk_rows):
       * block_rows (8,128)-legal and a multiple of chunk_rows,
       * num_blocks >= 2 whenever rows allows it (v7x megacore sharding),
       * chunk_rows caps the in-kernel working set at ~256 KiB."""
    if rows <= 8:
        return rows, rows                       # single full-extent block
    target = pl.cdiv(rows, 2)                   # aim for at least 2 grid blocks
    if target < _CHUNK_ROWS:
        br = _round_up(target, 8)
        return br, br
    br = min(max_rows, _round_up(target, _CHUNK_ROWS))
    return br, _CHUNK_ROWS


@functools.partial(jax.jit, static_argnames=("reduction",))
def xsigmoid_loss(y_t, y_prime_t, reduction="mean"):
    if reduction not in ("mean", "none"):
        raise ValueError(f"Unsupported reduction: {reduction}")

    orig_shape = y_t.shape
    orig_dtype = y_t.dtype

    yt2d, n = _prep(y_t)
    yp2d, _ = _prep(y_prime_t)
    rows = yt2d.shape[0]

    max_rows, vmem_limit = _tpu_budget()
    block_rows, chunk_rows = _pick_blocking(rows, max_rows)
    num_blocks = pl.cdiv(rows, block_rows)
    block_elems = block_rows * _LANES

    in_specs = [
        pl.BlockSpec((block_rows, _LANES), lambda i: (i, 0)),
        pl.BlockSpec((block_rows, _LANES), lambda i: (i, 0)),
    ]
    cparams = pltpu.CompilerParams(
        dimension_semantics=("parallel",),       # megacore-shardable grid
        vmem_limit_bytes=vmem_limit,
    )

    if reduction == "mean":
        rem = n - (num_blocks - 1) * block_elems   # static: valid elems in last block
        need_mask = rem < block_elems              # only the last block needs masking
        partials = pl.pallas_call(
            _make_mean_kernel(block_rows, chunk_rows, rem, need_mask),
            out_shape=jax.ShapeDtypeStruct((num_blocks, 1, _LANES), jnp.float32),
            grid=(num_blocks,),
            in_specs=in_specs,
            out_specs=pl.BlockSpec((1, 1, _LANES), lambda i: (i, 0, 0)),
            compiler_params=cparams,
        )(yt2d, yp2d)
        total = jnp.sum(partials, dtype=jnp.float32)
        return (total / jnp.float32(n)).astype(orig_dtype)

    # reduction == "none": lane-dense elementwise output; OOB rows of the
    # final partial block are dropped by Pallas on writeback.
    out2d = pl.pallas_call(
        _make_elem_kernel(block_rows, chunk_rows),
        out_shape=jax.ShapeDtypeStruct((rows, _LANES), orig_dtype),
        grid=(num_blocks,),
        in_specs=in_specs,
        out_specs=pl.BlockSpec((block_rows, _LANES), lambda i: (i, 0)),
        compiler_params=cparams,
    )(yt2d, yp2d)

    if rows * _LANES == n:                  # aligned fast path: free reshape
        return out2d.reshape(orig_shape)
    return out2d.reshape(-1)[:n].reshape(orig_shape)


def _reference(y_t, y_prime_t, reduction="mean"):
    e = y_t.astype(jnp.float32) - y_prime_t.astype(jnp.float32) + _EPS
    v = 2.0 * e / (1.0 + jnp.exp(-e)) - e
    return jnp.mean(v) if reduction == "mean" else v


def _check(shape, key):
    k1, k2 = jax.random.split(key)
    y_t = jax.random.normal(k1, shape, dtype=jnp.float32)
    y_p = jax.random.normal(k2, shape, dtype=jnp.float32)

    loss_mean = xsigmoid_loss(y_t, y_p, reduction="mean")
    loss_none = xsigmoid_loss(y_t, y_p, reduction="none")
    jax.block_until_ready(loss_mean)
    jax.block_until_ready(loss_none)

    ref_mean = _reference(y_t, y_p, "mean")
    ref_none = _reference(y_t, y_p, "none")
    assert jnp.allclose(loss_mean, ref_mean, atol=1e-5, rtol=1e-5), shape
    assert jnp.allclose(loss_none, ref_none, atol=1e-5, rtol=1e-5), shape
    assert loss_none.shape == shape


if __name__ == "__main__":
    key = jax.random.PRNGKey(0)
    keys = jax.random.split(key, 3)

    # Primary NCHW case (as the PyTorch module would receive): aligned, 2 blocks.
    _check((2, 4, 16, 16), keys[0])
    # Ragged case (n not a multiple of 128): exercises pad + last-block mask.
    _check((3, 5, 7), keys[1])
    # Multi-block case with a partial final block: exercises the parallel grid,
    # chunked accumulation and the masked last block.
    _check((4, 640, 128), keys[2])

    print("KERNEL_OK")
</pallas_src>

<mosaic_0001>
module attributes {stable_mosaic.version = 11 : i64} {
  func.func @kernel(%arg0: i32, %arg1: memref<8x128xf32, #tpu.memory_space<vmem>>, %arg2: memref<8x128xf32, #tpu.memory_space<vmem>>, %arg3: memref<1x1x128xf32, #tpu.memory_space<vmem>>) attributes {dimension_semantics = [#tpu.dimension_semantics<parallel>], iteration_bounds = array<i64: 2>, scalar_prefetch = 0 : i64, scratch_operands = 0 : i64, tpu.core_type = #tpu.core_type<tc>, window_params = [{transform_indices = @transform_0, window_bounds = array<i64: 8, 128>}, {transform_indices = @transform_1, window_bounds = array<i64: 8, 128>}, {transform_indices = @transform_2, window_bounds = array<i64: 1, 1, 128>}]} {
    %cst = arith.constant 0.000000e+00 : f32
    %0 = vector.broadcast %cst : f32 to vector<1x128xf32>
    %c0_i32 = arith.constant 0 : i32
    %c8_i32 = arith.constant 8 : i32
    %1 = arith.muli %c0_i32, %c8_i32 : i32
    %2 = tpu.assume_multiple %1, 8 : i32
    %3 = arith.index_cast %2 : i32 to index
    %c0 = arith.constant 0 : index
    %4 = vector.load %arg1[%3, %c0] : memref<8x128xf32, #tpu.memory_space<vmem>>, vector<8x128xf32>
    %5 = arith.index_cast %2 : i32 to index
    %c0_0 = arith.constant 0 : index
    %6 = vector.load %arg2[%5, %c0_0] : memref<8x128xf32, #tpu.memory_space<vmem>>, vector<8x128xf32>
    %7 = arith.subf %4, %6 : vector<8x128xf32>
    %cst_1 = arith.constant 9.99999996E-13 : f32
    %8 = vector.broadcast %cst_1 : f32 to vector<8x128xf32>
    %9 = arith.addf %7, %8 : vector<8x128xf32>
    %cst_2 = arith.constant 5.000000e-01 : f32
    %10 = vector.broadcast %cst_2 : f32 to vector<8x128xf32>
    %11 = arith.mulf %10, %9 : vector<8x128xf32>
    %12 = math.tanh %11 : vector<8x128xf32>
    %13 = arith.mulf %9, %12 : vector<8x128xf32>
    %cst_3 = arith.constant dense<0.000000e+00> : vector<128xf32>
    %14 = vector.multi_reduction <add>, %13, %cst_3 [0] : vector<8x128xf32> to vector<128xf32>
    %15 = vector.shape_cast %14 : vector<128xf32> to vector<1x128xf32>
    %16 = arith.addf %0, %15 : vector<1x128xf32>
    %c1_i32 = arith.constant 1 : i32
    %17 = vector.shape_cast %16 : vector<1x128xf32> to vector<1x1x128xf32>
    %c0_4 = arith.constant 0 : index
    %c0_5 = arith.constant 0 : index
    %c0_6 = arith.constant 0 : index
    %18 = vector.load %arg3[%c0_4, %c0_5, %c0_6] : memref<1x1x128xf32, #tpu.memory_space<vmem>>, vector<1x1x128xf32>
    tpu.vector_store %arg3[%c0_4, %c0_5, %c0_6], %17 {strides = array<i32>} : memref<1x1x128xf32, #tpu.memory_space<vmem>>, vector<1x1x128xf32>,
    return
  }
  func.func @transform_0(%arg0: i32) -> (i32, i32) {
    %c0_i32 = arith.constant 0 : i32
    %c0_i32_0 = arith.constant 0 : i32
    return %arg0, %c0_i32 : i32, i32
  }
  func.func @transform_1(%arg0: i32) -> (i32, i32) {
    %c0_i32 = arith.constant 0 : i32
    %c0_i32_0 = arith.constant 0 : i32
    return %arg0, %c0_i32 : i32, i32
  }
  func.func @transform_2(%arg0: i32) -> (i32, i32, i32) {
    %c0_i32 = arith.constant 0 : i32
    %c0_i32_0 = arith.constant 0 : i32
    %c0_i32_1 = arith.constant 0 : i32
    return %arg0, %c0_i32, %c0_i32_0 : i32, i32, i32
  }
}

</mosaic_0001>

<llo_original>
// kernel: xsigmoid_loss.1
$region0: #{xsigmoid_loss.1}
  #allocation0 [shape = 'u32[]', space=smem, size = 0x4, offset = 0x4, fixed_abs, tag = 'smem constant byte address 0x4 - core index']
  #allocation1 [shape = 'u32[72,128]{1,0:T(1,128)}', space=vmem, size = 0x9000, scoped, tag = 'internal scratch']
  %s0 = inlined_call_operand.vmem [shape: f32[16,128], index: 0, kind: input, shape index: {}]
  %s1 = inlined_call_operand.vmem [shape: f32[16,128], index: 1, kind: input, shape index: {}]
  %s2 = inlined_call_operand.vmem [shape: f32[2,1,128], index: 2, kind: output, shape index: {}]
  %s3 = sld [smem:[#allocation0]]
  $region41: #{xsigmoid_loss.1} parent=0
    _
  %s5 = ssub.s32 1, %s3
  %s6 = scalar_select 0, %s5, %s3
  loop: start=0, step=1, limit=4
  $region2: #{xsigmoid_loss.1} parent=0 // loop_pre_header
    _
  $region3: #{xsigmoid_loss.1} parent=0 // loop_header
    %s8 = sphi 0, %s12
    %p9 = scmp.ge.s32.totalorder %s8, 4
    %s18 = sphi 0, %s20
    %s21 = sphi 0, %s18
    %s22 = sphi 0, %s21
    %s38 = sphi 0, %s22
    %s44 = sphi 0, %s46
    %s47 = sphi 0, %s44
    %s48 = sphi 0, %s47
    %s64 = sphi 0, %s48
    %s70 = sphi 0, %s72
    %s73 = sphi 0, %s70
    %s74 = sphi 0, %s73
    %s90 = sphi 0, %s74
  $region4: #{xsigmoid_loss.1} parent=0 // loop_header_branch
    %11 = sbr.rel (%p9) target = $region8
  $region5: #{xsigmoid_loss.1} parent=0 // loop_body
    %s13 = ssub.s32 %s8, 1
    %s14 = ssub.s32 %s8, 2
    %s15 = sadd.s32 %s8, 1
    %s16 = ssub.s32 %s8, %s15
    %p17 = scmp.eq.s32.totalorder %s16, 0
    %s19 = sadd.s32 %s18, 1
    %s20 = scalar_select %p17, %s18, %s19
    %p23 = pneg %p17
    %p24 = scmp.eq.s32.totalorder %s8, 1
    %p25 = por %p23, %p24
    %p26 = scmp.ne.s32.totalorder %s18, %s21
    %p27 = scmp.eq.s32.totalorder %s8, 0
    %p28 = por %p26, %p27
    %p29 = scmp.ne.s32.totalorder %s18, %s21
    %p30 = scmp.eq.s32.totalorder %s13, 1
    %p31 = por %p29, %p30
    %p32 = scmp.ne.s32.totalorder %s21, %s22
    %p33 = scmp.eq.s32.totalorder %s13, 0
    %p34 = por %p32, %p33
    %p35 = scmp.ne.s32.totalorder %s21, %s22
    %p36 = scmp.eq.s32.totalorder %s14, 1
    %p37 = por %p35, %p36
    %p39 = scmp.ne.s32.totalorder %s22, %s38
    %p40 = scmp.eq.s32.totalorder %s14, 0
    %p41 = por %p39, %p40
    %s42 = ssub.s32 %s8, %s15
    %p43 = scmp.eq.s32.totalorder %s42, 0
    %s45 = sadd.s32 %s44, 1
    %s46 = scalar_select %p43, %s44, %s45
    %p49 = pneg %p43
    %p50 = scmp.eq.s32.totalorder %s8, 1
    %p51 = por %p49, %p50
    %p52 = scmp.ne.s32.totalorder %s44, %s47
    %p53 = scmp.eq.s32.totalorder %s8, 0
    %p54 = por %p52, %p53
    %p55 = scmp.ne.s32.totalorder %s44, %s47
    %p56 = scmp.eq.s32.totalorder %s13, 1
    %p57 = por %p55, %p56
    %p58 = scmp.ne.s32.totalorder %s47, %s48
    %p59 = scmp.eq.s32.totalorder %s13, 0
    %p60 = por %p58, %p59
    %p61 = scmp.ne.s32.totalorder %s47, %s48
    %p62 = scmp.eq.s32.totalorder %s14, 1
    %p63 = por %p61, %p62
    %p65 = scmp.ne.s32.totalorder %s48, %s64
    %p66 = scmp.eq.s32.totalorder %s14, 0
    %p67 = por %p65, %p66
    %s68 = ssub.s32 %s8, %s15
    %p69 = scmp.eq.s32.totalorder %s68, 0
    %s71 = sadd.s32 %s70, 1
    %s72 = scalar_select %p69, %s70, %s71
    %p75 = pneg %p69
    %p76 = scmp.eq.s32.totalorder %s8, 1
    %p77 = por %p75, %p76
    %p78 = scmp.ne.s32.totalorder %s70, %s73
    %p79 = scmp.eq.s32.totalorder %s8, 0
    %p80 = por %p78, %p79
    %p81 = scmp.ne.s32.totalorder %s70, %s73
    %p82 = scmp.eq.s32.totalorder %s13, 1
    %p83 = por %p81, %p82
    %p84 = scmp.ne.s32.totalorder %s73, %s74
    %p85 = scmp.eq.s32.totalorder %s13, 0
    %p86 = por %p84, %p85
    %p87 = scmp.ne.s32.totalorder %s73, %s74
    %p88 = scmp.eq.s32.totalorder %s14, 1
    %p89 = por %p87, %p88
    %p91 = scmp.ne.s32.totalorder %s74, %s90
    %p92 = scmp.eq.s32.totalorder %s14, 0
    %p93 = por %p91, %p92
    %p94 = scmp.le.s32.totalorder 1, %s8
    %p95 = scmp.lt.s32.totalorder %s8, 3
    %p96 = pnand %p94, %p95
    %p97 = pneg %p96
    // Predicated region
    $region9: #{xsigmoid_loss.1} parent=5 // pred_check
      _
    $region10: #{xsigmoid_loss.1} parent=5 // pred_check_branch
      %99 = sbr.rel (%p96) target = $region12
    $region11: #{xsigmoid_loss.1} parent=5 // pred_region
      %s100 = ssub.s32 %s8, 1
    $region12: #{xsigmoid_loss.1} parent=5 // pred_fallthru
      _
    %p101 = scmp.lt.s32.totalorder %s8, 2
    // Predicated region
    $region13: #{xsigmoid_loss.1} parent=5 // pred_check
      %p102 = pneg %p101
    $region14: #{xsigmoid_loss.1} parent=5 // pred_check_branch
      %104 = sbr.rel (%p102) target = $region16
    $region15: #{xsigmoid_loss.1} parent=5 // pred_region
      // Predicated region
      $region17: #{xsigmoid_loss.1} parent=15 // pred_check
        %p105 = pneg %p28
      $region18: #{xsigmoid_loss.1} parent=15 // pred_check_branch
        %107 = sbr.rel (%p105) target = $region20
      $region19: #{xsigmoid_loss.1} parent=15 // pred_region
        %p108 = scmp.lt.s32.totalorder %s8, 1
        %s109 = scalar_select %p108, %s8, 1
        %s110 = smul.addr %s109, 8
        %s111 = scalar_lea.vmem %s0, %s110
      $region20: #{xsigmoid_loss.1} parent=15 // pred_fallthru
        _
      // Predicated region
      $region21: #{xsigmoid_loss.1} parent=15 // pred_check
        %p112 = pneg %p54
      $region22: #{xsigmoid_loss.1} parent=15 // pred_check_branch
        %114 = sbr.rel (%p112) target = $region24
      $region23: #{xsigmoid_loss.1} parent=15 // pred_region
        %p115 = scmp.lt.s32.totalorder %s8, 1
        %s116 = scalar_select %p115, %s8, 1
        %s117 = smul.addr %s116, 8
        %s118 = scalar_lea.vmem %s1, %s117
      $region24: #{xsigmoid_loss.1} parent=15 // pred_fallthru
        _
    $region16: #{xsigmoid_loss.1} parent=5 // pred_fallthru
      _
    %p119 = scmp.le.s32.totalorder 1, %s8
    %p120 = scmp.lt.s32.totalorder %s8, 3
    %p121 = pnand %p119, %p120
    %p122 = pneg %p121
    // Predicated region
    $region25: #{xsigmoid_loss.1} parent=5 // pred_check
      _
    $region26: #{xsigmoid_loss.1} parent=5 // pred_check_branch
      %124 = sbr.rel (%p121) target = $region28
    $region27: #{xsigmoid_loss.1} parent=5 // pred_region
      %s125 = ssub.s32 %s8, 1
      %p126 = scmp.lt.s32.totalorder %s13, 1
      %s127 = scalar_select %p126, %s13, 1
      %s128 = smul.addr %s127, 8
      %s129 = scalar_lea.vmem %s0, %s128
      %p130 = pneg %p34
      %p131 = pneg %p31
      %p132 = scmp.lt.s32.totalorder %s13, 1
      %s133 = scalar_select %p132, %s13, 1
      %s134 = smul.addr %s133, 8
      %s135 = scalar_lea.vmem %s1, %s134
      %p136 = pneg %p60
      %p137 = pneg %p57
      %p138 = pneg %p86
      %p139 = pneg %p83
      %p140 = scmp.lt.s32.totalorder %s13, 1
      %s141 = scalar_select %p140, %s13, 1
      %s142 = scalar_lea.vmem %s2, %s141
      %p143 = scmp.lt.s32.totalorder %s13, 1
      %s144 = scalar_select %p143, %s13, 1
      %s145 = smul.addr %s144, 8
      %s146 = scalar_lea.vmem %s0, %s145
      %p147 = scmp.lt.s32.totalorder %s13, 1
      %s148 = scalar_select %p147, %s13, 1
      %s149 = smul.addr %s148, 8
      %s150 = scalar_lea.vmem %s1, %s149
      %p151 = scmp.lt.s32.totalorder %s13, 1
      %s152 = scalar_select %p151, %s13, 1
      %s153 = scalar_lea.vmem %s2, %s152
      %v154 = vld [vmem:[%s146] sm:$0xff]
      %v155 = vld [vmem:[%s150] sm:$0xff]
      %v156 = vsub.f32 %v154, %v155
      %v157 = vadd.f32 %v156, 1e-12
      %v158 = vmul.f32 %v157, 0.5
      %v159 = vtanh.pop %v158
      %v160 = vmul.f32 %v157, %v159
      %v161 = vrot.slane %v160, 4
      %v162 = vadd.f32 %v160, %v161
      %v163 = vrot.slane %v162, 2
      %v164 = vadd.f32 %v162, %v163
      %v165 = vrot.slane %v164, 1
      %v166 = vadd.f32 %v164, %v165
      %v167 = vadd.f32 %v166, 0.0
      %168 = vst [vmem:[%s153] sm:$0x1] %v167
      %p169 = scmp.lt.s32.totalorder %s13, 1
      %s170 = scalar_select %p169, %s13, 1
      %s171 = scalar_lea.vmem %s2, %s170
      // Predicated region
      $region29: #{xsigmoid_loss.1} parent=27 // pred_check
        %p172 = pneg %p83
      $region30: #{xsigmoid_loss.1} parent=27 // pred_check_branch
        %174 = sbr.rel (%p172) target = $region32
      $region31: #{xsigmoid_loss.1} parent=27 // pred_region
        _
      $region32: #{xsigmoid_loss.1} parent=27 // pred_fallthru
        _
    $region28: #{xsigmoid_loss.1} parent=5 // pred_fallthru
      _
    %p175 = scmp.le.s32.totalorder 2, %s8
    // Predicated region
    $region33: #{xsigmoid_loss.1} parent=5 // pred_check
      %p176 = pneg %p175
    $region34: #{xsigmoid_loss.1} parent=5 // pred_check_branch
      %178 = sbr.rel (%p176) target = $region36
    $region35: #{xsigmoid_loss.1} parent=5 // pred_region
      %s179 = ssub.s32 %s8, 2
      // Predicated region
      $region37: #{xsigmoid_loss.1} parent=35 // pred_check
        %p180 = pneg %p89
      $region38: #{xsigmoid_loss.1} parent=35 // pred_check_branch
        %182 = sbr.rel (%p180) target = $region40
      $region39: #{xsigmoid_loss.1} parent=35 // pred_region
        %p183 = scmp.lt.s32.totalorder %s14, 1
        %s184 = scalar_select %p183, %s14, 1
        %s185 = scalar_lea.vmem %s2, %s184
      $region40: #{xsigmoid_loss.1} parent=35 // pred_fallthru
        _
    $region36: #{xsigmoid_loss.1} parent=5 // pred_fallthru
      _
  $region6: #{xsigmoid_loss.1} parent=0 // loop_footer
    %s12 = sadd.s32 1, %s8
  $region7: #{xsigmoid_loss.1} parent=0 // loop_footer_branch
    %7 = sbr.rel target = $region3
  $region8: #{xsigmoid_loss.1} parent=0 // loop_exit
    _

</llo_original>
